<compile_context>
chip_gen: v5e
topology: v5e:2x2
jax: 0.10.0
libtpu: 0.0.40
codegen_flags: <defaults>
</compile_context>

<pallas_src>
import functools
import math

import jax
import jax.numpy as jnp
import numpy as np
from jax.experimental import pallas as pl
from jax.experimental.pallas import tpu as pltpu

ITERATIONS = 3


def _round_up(x, m):
    return ((x + m - 1) // m) * m


def _squash_ref(x, axis=-1):
    s2 = jnp.sum(x * x, axis=axis, keepdims=True) + 1e-10
    return (jnp.sqrt(s2) / (0.5 + s2)) * x


def capsule_fc_kernel(poses_ref, w_ref, p_ref, out_ref, *, n_in_p, n_out,
                      d_out, n_flat, iterations):
    """One batch tile of capsule transform + raw dynamic routing.

    poses_ref : (tb * n_in_p, d_in)  input poses (zero-padded capsules ok)
    w_ref     : (d_in, NF)           flattened conv1d kernel (NF lane-padded)
    p_ref     : (NF, NF)             capsule-group selector: P[c, c2] = 1 iff
                                     c and c2 belong to the same output capsule
                                     (padded columns -> 0); constant, resident.
    out_ref   : (tb, NF)             flattened squashed output poses
    """
    rows = poses_ref.shape[0]
    tb, nf = out_ref.shape

    w = w_ref[...]
    p_sel = p_ref[...]

    # ---- capsule transform: one lane-dense MXU matmul ------------------------
    # u[(t, n), j*d_out + k] = sum_d poses[t, n, d] * W[d, j*d_out + k]
    u = jnp.dot(poses_ref[...], w, preferred_element_type=jnp.float32)  # (rows, nf)
    u3 = u.reshape(tb, n_in_p, nf)          # free: n_in_p % 8 == 0, nf % 128 == 0

    def squash_wide(s):
        # per-capsule squared norm, replicated back across each capsule's lanes
        s2 = jnp.dot(s * s, p_sel, preferred_element_type=jnp.float32) + 1e-10
        return (jnp.sqrt(s2) / (0.5 + s2)) * s

    # ---- routing iteration 0 (constant-folded): softmax(ones) == 1 / n_out ---
    s = (1.0 / n_out) * jnp.sum(u3, axis=1)                      # (tb, nf)
    outputs = squash_wide(s)

    # Routing logits kept "wide": b_wide[r, j*d_out + k] == b[r, j], replicated
    # over the capsule's d_out lanes -> all logit ops run on lane-dense vregs.
    if nf == n_flat:
        b_wide = jnp.ones((rows, nf), dtype=jnp.float32)
    else:
        lane = jax.lax.broadcasted_iota(jnp.int32, (1, nf), 1)
        b_row = jnp.where(lane < n_flat, 1.0, -1e30).astype(jnp.float32)
        b_wide = jnp.broadcast_to(b_row, (rows, nf))

    for _ in range(1, iterations):
        # b[(t,n), j] += sum_k outputs[t, j*d+k] * u[(t,n), j*d+k]
        prod = u3 * outputs[:, None, :]                          # (tb, n_in_p, nf)
        delta = jnp.dot(prod.reshape(rows, nf), p_sel,
                        preferred_element_type=jnp.float32)      # segment-sum, wide
        b_wide = b_wide + delta

        # softmax over output capsules, evaluated in wide form
        m = jnp.max(b_wide, axis=-1, keepdims=True)              # (rows, 1)
        e = jnp.exp(b_wide - m)                                  # dense EUP work
        denom = jnp.sum(e, axis=-1, keepdims=True)               # = d_out * sum_j exp
        c_wide = e * (d_out / denom)                             # softmax, replicated

        # s[t, :] = sum_n c[(t,n), :] * u[(t,n), :]
        cu = (c_wide * u).reshape(tb, n_in_p, nf)
        s = jnp.sum(cu, axis=1)                                  # (tb, nf)
        outputs = squash_wide(s)

    out_ref[...] = outputs.astype(out_ref.dtype)


def capsule_fc_forward(poses, conv_kernel, output_capsule_num, out_poses_shape,
                       *, iterations=ITERATIONS, block_batch=None):
    """poses: (B, N_in, D_in) f32; conv_kernel: (D_out*N_out, D_in, 1) torch layout."""
    B, n_in, d_in = poses.shape
    n_out, d_out = output_capsule_num, out_poses_shape
    n_flat = n_out * d_out
    nf = _round_up(n_flat, 128)               # lane-pad flat capsule columns

    # Flatten/transpose the conv1d kernel: W[d, j*d_out+k] = kernel[j*d_out+k, d, 0]
    w = jnp.transpose(conv_kernel[:, :, 0], (1, 0)).astype(jnp.float32)
    if nf != n_flat:
        w = jnp.pad(w, ((0, 0), (0, nf - n_flat)))

    # Constant capsule-group selector (built once, resident inside the kernel).
    col = jnp.arange(nf)
    cap = col // d_out
    valid = col < n_flat
    p_sel = ((cap[:, None] == cap[None, :]) & valid[:, None]
             & valid[None, :]).astype(jnp.float32)

    # Pad the number of input capsules up to a multiple of 8 with zero poses:
    # zero capsules are exactly neutral in raw routing (u row == 0 contributes
    # nothing to s or the logits) and keep all (rows, nf) <-> (tb, n_in_p, nf)
    # reshapes sublane-aligned.
    n_in_p = _round_up(n_in, 8)
    if n_in_p != n_in:
        poses = jnp.pad(poses, ((0, 0), (0, n_in_p - n_in), (0, 0)))

    # ---- batch tile selection (VMEM-budgeted, not MXU-row-targeted) ----------
    #   2 x (rows, d_in->128 lanes) : double-buffered poses block
    #   ~5 x (rows, nf)             : live f32 intermediates (u, b_wide, ...)
    # ~20 MiB keeps v7x's 64 MiB VMEM comfortable (v5e/v6e have 128 MiB).
    vmem_tile_budget = 20 * 1024 * 1024
    d_in_lanes = _round_up(d_in, 128)
    bytes_per_row = 4 * (2 * d_in_lanes + 5 * nf)
    if block_batch is None:
        rows_cap = max(n_in_p, vmem_tile_budget // bytes_per_row)
        rows_target = min(4096, rows_cap)
        tb = max(1, rows_target // n_in_p)
        tb = min(tb, B)
        # Keep >= 2 grid steps for batches big enough to split so the
        # "parallel" axis can be sharded across v7x's two TensorCores.
        if tb >= B and B >= 16:
            tb = (B + 1) // 2
    else:
        tb = min(block_batch, B)
    if tb < B:
        tb = max(8, (tb // 8) * 8)   # multi-step grid: sublane-aligned out block
    b_pad = pl.cdiv(B, tb) * tb

    poses_p = poses
    if b_pad != B:
        poses_p = jnp.pad(poses, ((0, b_pad - B), (0, 0), (0, 0)))
    poses_2d = poses_p.reshape(b_pad * n_in_p, d_in)   # contiguous, free reshape

    kernel = functools.partial(capsule_fc_kernel, n_in_p=n_in_p, n_out=n_out,
                               d_out=d_out, n_flat=n_flat, iterations=iterations)

    out_flat = pl.pallas_call(
        kernel,
        out_shape=jax.ShapeDtypeStruct((b_pad, nf), poses.dtype),
        grid_spec=pltpu.PrefetchScalarGridSpec(
            num_scalar_prefetch=0,
            grid=(b_pad // tb,),
            in_specs=[
                pl.BlockSpec((tb * n_in_p, d_in), lambda g: (g, 0)),
                pl.BlockSpec((d_in, nf), lambda g: (0, 0)),   # resident weights
                pl.BlockSpec((nf, nf), lambda g: (0, 0)),     # resident selector P
            ],
            out_specs=pl.BlockSpec((tb, nf), lambda g: (g, 0)),
        ),
        compiler_params=pltpu.CompilerParams(
            dimension_semantics=("parallel",),
            vmem_limit_bytes=32 * 1024 * 1024),
    )(poses_2d, w, p_sel)

    # Lane-dense flat slab -> (B, N_out, D_out) is free layout plumbing outside.
    return out_flat[:B, :n_flat].reshape(B, n_out, d_out)


def torch_like_reference(poses, conv_kernel, n_out, d_out, iterations=ITERATIONS):
    """Literal JAX translation of the torch forward (for verification)."""
    B, n_in, d_in = poses.shape
    # F.conv1d(poses.permute(0,2,1), kernel): out[b,o,n] = sum_d kernel[o,d,0]*poses[b,n,d]
    conv = jnp.einsum("bnd,od->bon", poses, conv_kernel[:, :, 0])
    u = conv.reshape(B, n_in, n_out, d_out)          # .view(-1, N_in, N_out, D_out)
    u = u.reshape(B, n_out, d_out, n_in)             # .reshape(SHAPE[0], SHAPE[1], SHAPE[3], SHAPE[2])
    u = jnp.transpose(u, (0, 1, 3, 2))               # .permute(0, 1, 3, 2) -> (B, N_out, N_in, D_out)

    b_log = jnp.ones(u.shape[:3], dtype=poses.dtype)  # ones_like(u[:, :, :, 0])
    outputs = None
    for i in range(iterations):
        c = jax.nn.softmax(b_log, axis=1)
        s = jnp.squeeze(jnp.matmul(c[:, :, None, :], u), axis=2)
        outputs = _squash_ref(s, axis=-1)
        if i < iterations - 1:
            b_log = b_log + jnp.squeeze(
                jnp.matmul(outputs[:, :, None, :], jnp.swapaxes(u, 2, 3)), axis=2
            )
    return outputs


if __name__ == "__main__":
    # Small shapes consistent with the module's forward:
    B, N_IN, D_IN = 2, 8, 32          # poses_shape = D_IN
    N_OUT, D_OUT = 4, 32              # output_capsule_num, out_poses_shape (default = poses_shape)

    key = jax.random.PRNGKey(0)
    k_poses, k_w, k_beta, k_poses2 = jax.random.split(key, 4)

    poses = jax.random.normal(k_poses, (B, N_IN, D_IN), dtype=jnp.float32)

    # vec_transform.kernel: xavier_uniform on shape (D_OUT*N_OUT, D_IN, 1)
    fan_in, fan_out = D_IN * 1, D_OUT * N_OUT * 1
    bound = math.sqrt(6.0 / (fan_in + fan_out))
    conv_kernel = jax.random.uniform(
        k_w, (D_OUT * N_OUT, D_IN, 1), dtype=jnp.float32, minval=-bound, maxval=bound
    )

    # beta_a exists in the module but is unused by raw_routing (default path).
    beta_a = jax.random.uniform(
        k_beta, (1, N_OUT), dtype=jnp.float32,
        minval=-math.sqrt(6.0 / (1 + N_OUT)), maxval=math.sqrt(6.0 / (1 + N_OUT))
    )
    del beta_a
    # TODO(synk): att_routing (ent_vec is not None) path and capsule_dropout with
    # dropout > 0 are not implemented; default forward (ent_vec=None, dropout=0.0) only.

    out = capsule_fc_forward(poses, conv_kernel, N_OUT, D_OUT)
    out = jax.block_until_ready(out)
    ref = torch_like_reference(poses, conv_kernel, N_OUT, D_OUT)
    np.testing.assert_allclose(np.asarray(out), np.asarray(ref), rtol=1e-4, atol=1e-4)

    # Second check: exercise the batch-tiled multi-step grid + batch-padding path.
    B2 = 40
    poses2 = jax.random.normal(k_poses2, (B2, N_IN, D_IN), dtype=jnp.float32)
    out2 = capsule_fc_forward(poses2, conv_kernel, N_OUT, D_OUT, block_batch=32)
    out2 = jax.block_until_ready(out2)
    ref2 = torch_like_reference(poses2, conv_kernel, N_OUT, D_OUT)
    np.testing.assert_allclose(np.asarray(out2), np.asarray(ref2), rtol=1e-4, atol=1e-4)

    print("KERNEL_OK")
</pallas_src>

<mosaic_0001>
module attributes {stable_mosaic.version = 11 : i64} {
  func.func @capsule_fc_kernel(%arg0: i32, %arg1: memref<16x32xf32, #tpu.memory_space<vmem>>, %arg2: memref<32x128xf32, #tpu.memory_space<vmem>>, %arg3: memref<128x128xf32, #tpu.memory_space<vmem>>, %arg4: memref<2x128xf32, #tpu.memory_space<vmem>>) attributes {dimension_semantics = [#tpu.dimension_semantics<parallel>], iteration_bounds = array<i64: 1>, scalar_prefetch = 0 : i64, scratch_operands = 0 : i64, tpu.core_type = #tpu.core_type<tc>, window_params = [{transform_indices = @transform_0, window_bounds = array<i64: 16, 32>}, {pipeline_mode = #tpu.pipeline_mode<synchronous>, transform_indices = @transform_1, window_bounds = array<i64: 32, 128>}, {pipeline_mode = #tpu.pipeline_mode<synchronous>, transform_indices = @transform_2, window_bounds = array<i64: 128, 128>}, {transform_indices = @transform_3, window_bounds = array<i64: 2, 128>}]} {
    %c0 = arith.constant 0 : index
    %c0_0 = arith.constant 0 : index
    %0 = vector.load %arg2[%c0, %c0_0] : memref<32x128xf32, #tpu.memory_space<vmem>>, vector<32x128xf32>
    %c0_1 = arith.constant 0 : index
    %c0_2 = arith.constant 0 : index
    %1 = vector.load %arg3[%c0_1, %c0_2] : memref<128x128xf32, #tpu.memory_space<vmem>>, vector<128x128xf32>
    %c0_3 = arith.constant 0 : index
    %c0_4 = arith.constant 0 : index
    %2 = vector.load %arg1[%c0_3, %c0_4] : memref<16x32xf32, #tpu.memory_space<vmem>>, vector<16x32xf32>
    %cst = arith.constant dense<0.000000e+00> : vector<16x128xf32>
    %3 = tpu.matmul %2, %0, %cst {dimension_numbers = #tpu.dot_dimension_numbers<[1], [0], [0], [1], [0, 0, 1, 1], [], []>} : vector<16x32xf32>, vector<32x128xf32>, vector<16x128xf32> -> vector<16x128xf32>
    %4 = vector.shape_cast %3 : vector<16x128xf32> to vector<2x8x128xf32>
    %cst_5 = arith.constant dense<0.000000e+00> : vector<2x128xf32>
    %5 = vector.multi_reduction <add>, %4, %cst_5 [1] : vector<2x8x128xf32> to vector<2x128xf32>
    %cst_6 = arith.constant 2.500000e-01 : f32
    %6 = vector.broadcast %cst_6 : f32 to vector<2x128xf32>
    %7 = arith.mulf %6, %5 : vector<2x128xf32>
    %8 = arith.mulf %7, %7 : vector<2x128xf32>
    %cst_7 = arith.constant dense<0.000000e+00> : vector<2x128xf32>
    %9 = tpu.matmul %8, %1, %cst_7 {dimension_numbers = #tpu.dot_dimension_numbers<[1], [0], [0], [1], [0, 0, 1, 1], [], []>} : vector<2x128xf32>, vector<128x128xf32>, vector<2x128xf32> -> vector<2x128xf32>
    %cst_8 = arith.constant 1.000000e-10 : f32
    %10 = vector.broadcast %cst_8 : f32 to vector<2x128xf32>
    %11 = arith.addf %9, %10 : vector<2x128xf32>
    %12 = math.sqrt %11 : vector<2x128xf32>
    %cst_9 = arith.constant 5.000000e-01 : f32
    %13 = vector.broadcast %cst_9 : f32 to vector<2x128xf32>
    %14 = arith.addf %13, %11 : vector<2x128xf32>
    %15 = arith.divf %12, %14 : vector<2x128xf32>
    %16 = arith.mulf %15, %7 : vector<2x128xf32>
    %cst_10 = arith.constant 1.000000e+00 : f32
    %17 = vector.broadcast %cst_10 : f32 to vector<16x128xf32>
    %18 = vector.shape_cast %16 : vector<2x128xf32> to vector<2x1x128xf32>
    %19 = vector.broadcast %18 : vector<2x1x128xf32> to vector<2x8x128xf32>
    %20 = arith.mulf %4, %19 : vector<2x8x128xf32>
    %21 = vector.shape_cast %20 : vector<2x8x128xf32> to vector<16x128xf32>
    %cst_11 = arith.constant dense<0.000000e+00> : vector<16x128xf32>
    %22 = tpu.matmul %21, %1, %cst_11 {dimension_numbers = #tpu.dot_dimension_numbers<[1], [0], [0], [1], [0, 0, 1, 1], [], []>} : vector<16x128xf32>, vector<128x128xf32>, vector<16x128xf32> -> vector<16x128xf32>
    %23 = arith.addf %17, %22 : vector<16x128xf32>
    %cst_12 = arith.constant dense<0xFF800000> : vector<16xf32>
    %24 = vector.multi_reduction <maximumf>, %23, %cst_12 [1] : vector<16x128xf32> to vector<16xf32>
    %25 = vector.shape_cast %24 : vector<16xf32> to vector<16x1xf32>
    %26 = vector.broadcast %25 : vector<16x1xf32> to vector<16x128xf32>
    %27 = arith.subf %23, %26 : vector<16x128xf32>
    %28 = math.exp %27 : vector<16x128xf32>
    %cst_13 = arith.constant dense<0.000000e+00> : vector<16xf32>
    %29 = vector.multi_reduction <add>, %28, %cst_13 [1] : vector<16x128xf32> to vector<16xf32>
    %30 = vector.shape_cast %29 : vector<16xf32> to vector<16x1xf32>
    %cst_14 = arith.constant 3.200000e+01 : f32
    %31 = vector.broadcast %cst_14 : f32 to vector<16x1xf32>
    %32 = arith.divf %31, %30 : vector<16x1xf32>
    %33 = vector.broadcast %32 : vector<16x1xf32> to vector<16x128xf32>
    %34 = arith.mulf %28, %33 : vector<16x128xf32>
    %35 = arith.mulf %34, %3 : vector<16x128xf32>
    %36 = vector.shape_cast %35 : vector<16x128xf32> to vector<2x8x128xf32>
    %cst_15 = arith.constant dense<0.000000e+00> : vector<2x128xf32>
    %37 = vector.multi_reduction <add>, %36, %cst_15 [1] : vector<2x8x128xf32> to vector<2x128xf32>
    %38 = arith.mulf %37, %37 : vector<2x128xf32>
    %cst_16 = arith.constant dense<0.000000e+00> : vector<2x128xf32>
    %39 = tpu.matmul %38, %1, %cst_16 {dimension_numbers = #tpu.dot_dimension_numbers<[1], [0], [0], [1], [0, 0, 1, 1], [], []>} : vector<2x128xf32>, vector<128x128xf32>, vector<2x128xf32> -> vector<2x128xf32>
    %cst_17 = arith.constant 1.000000e-10 : f32
    %40 = vector.broadcast %cst_17 : f32 to vector<2x128xf32>
    %41 = arith.addf %39, %40 : vector<2x128xf32>
    %42 = math.sqrt %41 : vector<2x128xf32>
    %cst_18 = arith.constant 5.000000e-01 : f32
    %43 = vector.broadcast %cst_18 : f32 to vector<2x128xf32>
    %44 = arith.addf %43, %41 : vector<2x128xf32>
    %45 = arith.divf %42, %44 : vector<2x128xf32>
    %46 = arith.mulf %45, %37 : vector<2x128xf32>
    %47 = vector.shape_cast %46 : vector<2x128xf32> to vector<2x1x128xf32>
    %48 = vector.broadcast %47 : vector<2x1x128xf32> to vector<2x8x128xf32>
    %49 = arith.mulf %4, %48 : vector<2x8x128xf32>
    %50 = vector.shape_cast %49 : vector<2x8x128xf32> to vector<16x128xf32>
    %cst_19 = arith.constant dense<0.000000e+00> : vector<16x128xf32>
    %51 = tpu.matmul %50, %1, %cst_19 {dimension_numbers = #tpu.dot_dimension_numbers<[1], [0], [0], [1], [0, 0, 1, 1], [], []>} : vector<16x128xf32>, vector<128x128xf32>, vector<16x128xf32> -> vector<16x128xf32>
    %52 = arith.addf %23, %51 : vector<16x128xf32>
    %cst_20 = arith.constant dense<0xFF800000> : vector<16xf32>
    %53 = vector.multi_reduction <maximumf>, %52, %cst_20 [1] : vector<16x128xf32> to vector<16xf32>
    %54 = vector.shape_cast %53 : vector<16xf32> to vector<16x1xf32>
    %55 = vector.broadcast %54 : vector<16x1xf32> to vector<16x128xf32>
    %56 = arith.subf %52, %55 : vector<16x128xf32>
    %57 = math.exp %56 : vector<16x128xf32>
    %cst_21 = arith.constant dense<0.000000e+00> : vector<16xf32>
    %58 = vector.multi_reduction <add>, %57, %cst_21 [1] : vector<16x128xf32> to vector<16xf32>
    %59 = vector.shape_cast %58 : vector<16xf32> to vector<16x1xf32>
    %cst_22 = arith.constant 3.200000e+01 : f32
    %60 = vector.broadcast %cst_22 : f32 to vector<16x1xf32>
    %61 = arith.divf %60, %59 : vector<16x1xf32>
    %62 = vector.broadcast %61 : vector<16x1xf32> to vector<16x128xf32>
    %63 = arith.mulf %57, %62 : vector<16x128xf32>
    %64 = arith.mulf %63, %3 : vector<16x128xf32>
    %65 = vector.shape_cast %64 : vector<16x128xf32> to vector<2x8x128xf32>
    %cst_23 = arith.constant dense<0.000000e+00> : vector<2x128xf32>
    %66 = vector.multi_reduction <add>, %65, %cst_23 [1] : vector<2x8x128xf32> to vector<2x128xf32>
    %67 = arith.mulf %66, %66 : vector<2x128xf32>
    %cst_24 = arith.constant dense<0.000000e+00> : vector<2x128xf32>
    %68 = tpu.matmul %67, %1, %cst_24 {dimension_numbers = #tpu.dot_dimension_numbers<[1], [0], [0], [1], [0, 0, 1, 1], [], []>} : vector<2x128xf32>, vector<128x128xf32>, vector<2x128xf32> -> vector<2x128xf32>
    %cst_25 = arith.constant 1.000000e-10 : f32
    %69 = vector.broadcast %cst_25 : f32 to vector<2x128xf32>
    %70 = arith.addf %68, %69 : vector<2x128xf32>
    %71 = math.sqrt %70 : vector<2x128xf32>
    %cst_26 = arith.constant 5.000000e-01 : f32
    %72 = vector.broadcast %cst_26 : f32 to vector<2x128xf32>
    %73 = arith.addf %72, %70 : vector<2x128xf32>
    %74 = arith.divf %71, %73 : vector<2x128xf32>
    %75 = arith.mulf %74, %66 : vector<2x128xf32>
    %c0_27 = arith.constant 0 : index
    %c0_28 = arith.constant 0 : index
    %76 = vector.load %arg4[%c0_27, %c0_28] : memref<2x128xf32, #tpu.memory_space<vmem>>, vector<2x128xf32>
    tpu.vector_store %arg4[%c0_27, %c0_28], %75 {strides = array<i32>} : memref<2x128xf32, #tpu.memory_space<vmem>>, vector<2x128xf32>,
    return
  }
  func.func @transform_0(%arg0: i32) -> (i32, i32) {
    %c0_i32 = arith.constant 0 : i32
    %c0_i32_0 = arith.constant 0 : i32
    return %arg0, %c0_i32 : i32, i32
  }
  func.func @transform_1(%arg0: i32) -> (i32, i32) {
    %c0_i32 = arith.constant 0 : i32
    %c0_i32_0 = arith.constant 0 : i32
    %c0_i32_1 = arith.constant 0 : i32
    return %c0_i32, %c0_i32_0 : i32, i32
  }
  func.func @transform_2(%arg0: i32) -> (i32, i32) {
    %c0_i32 = arith.constant 0 : i32
    %c0_i32_0 = arith.constant 0 : i32
    %c0_i32_1 = arith.constant 0 : i32
    return %c0_i32, %c0_i32_0 : i32, i32
  }
  func.func @transform_3(%arg0: i32) -> (i32, i32) {
    %c0_i32 = arith.constant 0 : i32
    %c0_i32_0 = arith.constant 0 : i32
    return %arg0, %c0_i32 : i32, i32
  }
}

</mosaic_0001>

<llo_original>
// kernel: tpu_custom_call.1
$region0: #{tpu_custom_call.1}
  #allocation0 [shape = 'u32[]', space=smem, size = 0x4, offset = 0x4, fixed_abs, tag = 'smem constant byte address 0x4 - core index']
  #allocation1 [shape = 'u32[72,128]{1,0:T(1,128)}', space=vmem, size = 0x9000, scoped, tag = 'internal scratch']
  %s0 = inlined_call_operand.hbm [shape: f32[16,32], index: 0, kind: input, shape index: {}]
  %s1 = inlined_call_operand.hbm [shape: f32[32,128], index: 1, kind: input, shape index: {}]
  %s2 = inlined_call_operand.hbm [shape: f32[128,128], index: 2, kind: input, shape index: {}]
  %s3 = inlined_call_operand.hbm [shape: f32[2,128], index: 3, kind: output, shape index: {}]
  %s4 = sld [smem:[#allocation0]]
  $region34: #{tpu_custom_call.1} parent=0
    _
  %s6 = ssub.s32 1, %s4
  %s7 = scalar_select 0, %s6, %s4
  $region1: #{tpu_custom_call.1} parent=0
    #allocation2 [shape = 'u8[8192]{0}', space=vmem, size = 0x2000, scoped, tag = 'input window, operand 0, single buffered']
    #allocation3 [shape = 's32[1]{0}', space=sflag, size = 0x4, scoped, tag = 'scoped memory for tpu_custom_call.1']
    #allocation4 [shape = 's32[1]{0}', space=sflag, size = 0x4, scoped, tag = 'scoped memory for tpu_custom_call.1']
    #allocation5 [shape = 'u8[16384]{0}', space=vmem, size = 0x4000, scoped, tag = 'input window, operand 1, single buffered']
    #allocation6 [shape = 's32[1]{0}', space=sflag, size = 0x4, scoped, tag = 'scoped memory for tpu_custom_call.1']
    #allocation7 [shape = 'u8[65536]{0}', space=vmem, size = 0x10000, scoped, tag = 'input window, operand 2, single buffered']
    #allocation8 [shape = 'u8[1024]{0}', space=vmem, size = 0x400, scoped, tag = 'output window, operand 0, single buffered']
    %8 = vsyncpa [#allocation3], 0
    %9 = vsyncpa [#allocation6], 0
    %10 = vsyncpa [#allocation4], 0
    // Predicated region
    $region2: #{tpu_custom_call.1} parent=1 // pred_check
      _
    $region3: #{tpu_custom_call.1} parent=1 // pred_check_branch
      %12 = sbr.rel (0) target = $region5
    $region4: #{tpu_custom_call.1} parent=1 // pred_region
      %14 = vsyncadd [#allocation3], 0
      %s15 = sshll.u32 %s0, 4
      %s16 = int_to_ptr.hbm [resolvable:$true] %s15
      %s17 = sshll.u32 [#allocation2], 4
      %s18 = int_to_ptr.vmem [resolvable:$true] %s17
      %23 = dma.hbm_to_vmem [thread:$0]  %s16, 256, %s18, [#allocation3], 128, 128, 8
    $region5: #{tpu_custom_call.1} parent=1 // pred_fallthru
      _
    // Predicated region
    $region6: #{tpu_custom_call.1} parent=1 // pred_check
      _
    $region7: #{tpu_custom_call.1} parent=1 // pred_check_branch
      %25 = sbr.rel (0) target = $region9
    $region8: #{tpu_custom_call.1} parent=1 // pred_region
      %27 = vsyncadd [#allocation6], 0
      %s28 = sshll.u32 %s1, 4
      %s29 = int_to_ptr.hbm [resolvable:$true] %s28
      %s30 = sshll.u32 [#allocation5], 4
      %s31 = int_to_ptr.vmem [resolvable:$true] %s30
      %36 = dma.hbm_to_vmem [thread:$0]  %s29, 512, %s31, [#allocation6], 128, 128, 8
    $region9: #{tpu_custom_call.1} parent=1 // pred_fallthru
      _
    // Predicated region
    $region10: #{tpu_custom_call.1} parent=1 // pred_check
      _
    $region11: #{tpu_custom_call.1} parent=1 // pred_check_branch
      %38 = sbr.rel (0) target = $region13
    $region12: #{tpu_custom_call.1} parent=1 // pred_region
      %40 = vsyncadd [#allocation6], 0
      %s41 = sshll.u32 %s2, 4
      %s42 = int_to_ptr.hbm [resolvable:$true] %s41
      %s43 = sshll.u32 [#allocation7], 4
      %s44 = int_to_ptr.vmem [resolvable:$true] %s43
      %49 = dma.hbm_to_vmem [thread:$0]  %s42, 2048, %s44, [#allocation6], 128, 128, 8
    $region13: #{tpu_custom_call.1} parent=1 // pred_fallthru
      _
    // Predicated region
    $region14: #{tpu_custom_call.1} parent=1 // pred_check
      _
    $region15: #{tpu_custom_call.1} parent=1 // pred_check_branch
      %51 = sbr.rel (0) target = $region17
    $region16: #{tpu_custom_call.1} parent=1 // pred_region
      %53 = dma.done [#allocation3], 256
    $region17: #{tpu_custom_call.1} parent=1 // pred_fallthru
      _
    // Predicated region
    $region18: #{tpu_custom_call.1} parent=1 // pred_check
      _
    $region19: #{tpu_custom_call.1} parent=1 // pred_check_branch
      %55 = sbr.rel (0) target = $region21
    $region20: #{tpu_custom_call.1} parent=1 // pred_region
      %57 = dma.done [#allocation6], 512
    $region21: #{tpu_custom_call.1} parent=1 // pred_fallthru
      _
    // Predicated region
    $region22: #{tpu_custom_call.1} parent=1 // pred_check
      _
    $region23: #{tpu_custom_call.1} parent=1 // pred_check_branch
      %59 = sbr.rel (0) target = $region25
    $region24: #{tpu_custom_call.1} parent=1 // pred_region
      %61 = dma.done [#allocation6], 2048
    $region25: #{tpu_custom_call.1} parent=1 // pred_fallthru
      _
    %v62 = vld [vmem:[#allocation5] sm:$0xff]
    %v63 = vld [vmem:[#allocation5 + $0x8] sm:$0xff]
    %v64 = vld [vmem:[#allocation5 + $0x10] sm:$0xff]
    %v65 = vld [vmem:[#allocation5 + $0x18] sm:$0xff]
    %v66 = vld [vmem:[#allocation7] sm:$0xff]
    %v67 = vld [vmem:[#allocation7 + $0x8] sm:$0xff]
    %v68 = vld [vmem:[#allocation7 + $0x10] sm:$0xff]
    %v69 = vld [vmem:[#allocation7 + $0x18] sm:$0xff]
    %v70 = vld [vmem:[#allocation7 + $0x20] sm:$0xff]
    %v71 = vld [vmem:[#allocation7 + $0x28] sm:$0xff]
    %v72 = vld [vmem:[#allocation7 + $0x30] sm:$0xff]
    %v73 = vld [vmem:[#allocation7 + $0x38] sm:$0xff]
    %v74 = vld [vmem:[#allocation7 + $0x40] sm:$0xff]
    %v75 = vld [vmem:[#allocation7 + $0x48] sm:$0xff]
    %v76 = vld [vmem:[#allocation7 + $0x50] sm:$0xff]
    %v77 = vld [vmem:[#allocation7 + $0x58] sm:$0xff]
    %v78 = vld [vmem:[#allocation7 + $0x60] sm:$0xff]
    %v79 = vld [vmem:[#allocation7 + $0x68] sm:$0xff]
    %v80 = vld [vmem:[#allocation7 + $0x70] sm:$0xff]
    %v81 = vld [vmem:[#allocation7 + $0x78] sm:$0xff]
    %v82 = vld [vmem:[#allocation2] sm:$0xff]
    %v83 = vld [vmem:[#allocation2 + $0x8] sm:$0xff]
    %vm84 = vcmask 261120
    %v86 = vsel %vm84, %v82, 0
    %v89 = vsel %vm84, %v83, 0
    %91 = vmatpush.msra.mxu0 0.0
    %92 = vmatpush.msra.mxu0 0.0
    %93 = vmatpush.msra.mxu0 0.0
    %94 = vmatpush.msra.mxu0 0.0
    %95 = vmatpush.msra.mxu0 0.0
    %96 = vmatpush.msra.mxu0 0.0
    %97 = vmatpush.msra.mxu0 0.0
    %98 = vmatpush.msra.mxu0 0.0
    %99 = vmatpush.msra.mxu0 0.0
    %100 = vmatpush.msra.mxu0 0.0
    %101 = vmatpush.msra.mxu0 0.0
    %102 = vmatpush.msra.mxu0 0.0
    %103 = vmatpush.msra.mxu0 %v65
    %104 = vmatpush.msra.mxu0 %v64
    %105 = vmatpush.msra.mxu0 %v63
    %106 = vmatpush.msra.mxu0 %v62
    %107 = vmatmul.f32.gmra.mxu0 %v86
    %v108 = vpop.f32.mrf.mxu0
    %v109 = vadd.f32 0.0, %v108
    %110 = vmatmul.f32.gmra.mxu0 %v89
    %v111 = vpop.f32.mrf.mxu0
    %v112 = vadd.f32 0.0, %v111
    %113 = vdwg.mxu0
    %v114 = vrot.slane %v109, 4
    %v115 = vadd.f32 %v109, %v114
    %v116 = vrot.slane %v115, 2
    %v117 = vadd.f32 %v115, %v116
    %v118 = vrot.slane %v117, 1
    %v119 = vadd.f32 %v117, %v118
    %v120 = vrot.slane %v112, 4
    %v121 = vadd.f32 %v112, %v120
    %v122 = vrot.slane %v121, 2
    %v123 = vadd.f32 %v121, %v122
    %v124 = vrot.slane %v123, 1
    %v125 = vadd.f32 %v123, %v124
    %v126 = vmul.f32 %v119, 0.25
    %v127 = vmul.f32 %v125, 0.25
    %v128 = vmul.f32 %v126, %v126
    %v129 = vmul.f32 %v127, %v127
    %vm132 = vcmask 1041409
    %v133 = vsel %vm132, %v129, %v128
    %135 = vmatpush.msra.mxu0 %v81
    %136 = vmatpush.msra.mxu0 %v80
    %137 = vmatpush.msra.mxu0 %v79
    %138 = vmatpush.msra.mxu0 %v78
    %139 = vmatpush.msra.mxu0 %v77
    %140 = vmatpush.msra.mxu0 %v76
    %141 = vmatpush.msra.mxu0 %v75
    %142 = vmatpush.msra.mxu0 %v74
    %143 = vmatpush.msra.mxu0 %v73
    %144 = vmatpush.msra.mxu0 %v72
    %145 = vmatpush.msra.mxu0 %v71
    %146 = vmatpush.msra.mxu0 %v70
    %147 = vmatpush.msra.mxu0 %v69
    %148 = vmatpush.msra.mxu0 %v68
    %149 = vmatpush.msra.mxu0 %v67
    %150 = vmatpush.msra.mxu0 %v66
    %151 = vmatmul.f32.gmra.mxu0 %v133
    %v152 = vpop.f32.mrf.mxu0
    %v153 = vadd.f32 1e-10, %v152
    %154 = vdwg.mxu0
    %v155 = vrsqrt.pop %v153
    %v156 = vmul.f32 %v155, %v153
    %v157 = vmul.f32 %v156, %v155
    %v158 = vmul.f32 0.5, %v157
    %v159 = vsub.f32 1.5, %v158
    %v160 = vmul.f32 %v155, %v159
    %v161 = vmul.f32 %v153, %v160
    %vm162 = vcmp.eq.f32.partialorder %v153, inf
    %v163 = vsel %vm162, %v153, %v161
    %vm164 = vcmp.eq.f32.partialorder %v153, 0.0
    %v165 = vand.u32 %v153, 2147483648
    %v166 = vsel %vm164, %v165, %v163
    %v167 = vadd.f32 %v153, 0.5
    %v168 = vrcp.pop %v167
    %v169 = vmul.f32 %v167, %v168
    %v170 = vsub.f32 1.0, %v169
    %v171 = vmul.f32 %v168, %v170
    %v172 = vadd.f32 %v168, %v171
    %vm173 = vweird.f32 %v167
    %vm174 = vweird.f32 %v168
    %vm175 = vmor %vm173, %vm174
    %v176 = vsel %vm175, %v168, %v172
    %v177 = vand.u32 2147483647, %v167
    %vm178 = vcmp.eq.f32.partialorder %v177, 8.507059e+37
    %v179 = vand.u32 %v167, 2147483648
    %v180 = vor.u32 1.1754944e-38, %v179
    %v181 = vsel %vm178, %v180, %v176
    %v182 = vmul.f32 %v166, %v181
    %v185 = vsel %vm132, %v127, %v126
    %v187 = vmul.f32 %v182, %v185
    %v189 = vrot.slane %v187, 1
    %v190 = vperm.slane %v187, 0
    %v191 = vperm.slane %v189, 0
    %v194 = vmul.f32 %v109, %v190
    %v195 = vmul.f32 %v112, %v191
    %196 = vmatpush.msra.mxu0 %v81
    %197 = vmatpush.msra.mxu0 %v80
    %198 = vmatpush.msra.mxu0 %v79
    %199 = vmatpush.msra.mxu0 %v78
    %200 = vmatpush.msra.mxu0 %v77
    %201 = vmatpush.msra.mxu0 %v76
    %202 = vmatpush.msra.mxu0 %v75
    %203 = vmatpush.msra.mxu0 %v74
    %204 = vmatpush.msra.mxu0 %v73
    %205 = vmatpush.msra.mxu0 %v72
    %206 = vmatpush.msra.mxu0 %v71
    %207 = vmatpush.msra.mxu0 %v70
    %208 = vmatpush.msra.mxu0 %v69
    %209 = vmatpush.msra.mxu0 %v68
    %210 = vmatpush.msra.mxu0 %v67
    %211 = vmatpush.msra.mxu0 %v66
    %212 = vmatmul.f32.gmra.mxu0 %v194
    %v213 = vpop.f32.mrf.mxu0
    %v214 = vadd.f32 1.0, %v213
    %215 = vmatmul.f32.gmra.mxu0 %v195
    %v216 = vpop.f32.mrf.mxu0
    %v217 = vadd.f32 1.0, %v216
    %218 = vdwg.mxu0
    %219 = vmax.xlane.f32.xlu0 %v214
    %v220 = vpop.xlane.xlu0 %219
    %221 = vmax.xlane.f32.xlu0 %v217
    %v222 = vpop.xlane.xlu0 %221
    %v223 = vsub.f32 %v214, %v220
    %v224 = vsub.f32 %v217, %v222
    %v225 = vmul.f32 %v223, 1.442695
    %v226 = vpow.pop %v225
    %v227 = vmul.f32 %v224, 1.442695
    %v228 = vpow.pop %v227
    %229 = vadd.xlane.f32.xlu0 %v226
    %v230 = vpop.xlane.xlu0 %229
    %231 = vadd.xlane.f32.xlu0 %v228
    %v232 = vpop.xlane.xlu0 %231
    %v233 = vrcp.pop %v230
    %v234 = vmul.f32 %v230, %v233
    %v235 = vsub.f32 1.0, %v234
    %v236 = vmul.f32 %v233, %v235
    %v237 = vadd.f32 %v233, %v236
    %vm238 = vweird.f32 %v230
    %vm239 = vweird.f32 %v233
    %vm240 = vmor %vm238, %vm239
    %v241 = vsel %vm240, %v233, %v237
    %v242 = vand.u32 2147483647, %v230
    %vm243 = vcmp.eq.f32.partialorder %v242, 8.507059e+37
    %v244 = vand.u32 %v230, 2147483648
    %v245 = vor.u32 1.1754944e-38, %v244
    %v246 = vsel %vm243, %v245, %v241
    %v247 = vmul.f32 32.0, %v246
    %v248 = vrcp.pop %v232
    %v249 = vmul.f32 %v232, %v248
    %v250 = vsub.f32 1.0, %v249
    %v251 = vmul.f32 %v248, %v250
    %v252 = vadd.f32 %v248, %v251
    %vm253 = vweird.f32 %v232
    %vm254 = vweird.f32 %v248
    %vm255 = vmor %vm253, %vm254
    %v256 = vsel %vm255, %v248, %v252
    %v257 = vand.u32 2147483647, %v232
    %vm258 = vcmp.eq.f32.partialorder %v257, 8.507059e+37
    %v259 = vand.u32 %v232, 2147483648
    %v260 = vor.u32 1.1754944e-38, %v259
    %v261 = vsel %vm258, %v260, %v256
    %v262 = vmul.f32 32.0, %v261
    %v263 = vmul.f32 %v226, %v247
    %v264 = vmul.f32 %v228, %v262
    %v265 = vmul.f32 %v263, %v109
    %v266 = vmul.f32 %v264, %v112
    %v267 = vrot.slane %v265, 4
    %v268 = vadd.f32 %v265, %v267
    %v269 = vrot.slane %v268, 2
    %v270 = vadd.f32 %v268, %v269
    %v271 = vrot.slane %v270, 1
    %v272 = vadd.f32 %v270, %v271
    %v273 = vrot.slane %v266, 4
    %v274 = vadd.f32 %v266, %v273
    %v275 = vrot.slane %v274, 2
    %v276 = vadd.f32 %v274, %v275
    %v277 = vrot.slane %v276, 1
    %v278 = vadd.f32 %v276, %v277
    %v279 = vmul.f32 %v272, %v272
    %v280 = vmul.f32 %v278, %v278
    %v283 = vsel %vm132, %v280, %v279
    %285 = vmatpush.msra.mxu0 %v81
    %286 = vmatpush.msra.mxu0 %v80
    %287 = vmatpush.msra.mxu0 %v79
    %288 = vmatpush.msra.mxu0 %v78
    %289 = vmatpush.msra.mxu0 %v77
    %290 = vmatpush.msra.mxu0 %v76
    %291 = vmatpush.msra.mxu0 %v75
    %292 = vmatpush.msra.mxu0 %v74
    %293 = vmatpush.msra.mxu0 %v73
    %294 = vmatpush.msra.mxu0 %v72
    %295 = vmatpush.msra.mxu0 %v71
    %296 = vmatpush.msra.mxu0 %v70
    %297 = vmatpush.msra.mxu0 %v69
    %298 = vmatpush.msra.mxu0 %v68
    %299 = vmatpush.msra.mxu0 %v67
    %300 = vmatpush.msra.mxu0 %v66
    %301 = vmatmul.f32.gmra.mxu0 %v283
    %v302 = vpop.f32.mrf.mxu0
    %v303 = vadd.f32 1e-10, %v302
    %304 = vdwg.mxu0
    %v305 = vrsqrt.pop %v303
    %v306 = vmul.f32 %v305, %v303
    %v307 = vmul.f32 %v306, %v305
    %v308 = vmul.f32 0.5, %v307
    %v309 = vsub.f32 1.5, %v308
    %v310 = vmul.f32 %v305, %v309
    %v311 = vmul.f32 %v303, %v310
    %vm312 = vcmp.eq.f32.partialorder %v303, inf
    %v313 = vsel %vm312, %v303, %v311
    %vm314 = vcmp.eq.f32.partialorder %v303, 0.0
    %v315 = vand.u32 %v303, 2147483648
    %v316 = vsel %vm314, %v315, %v313
    %v317 = vadd.f32 %v303, 0.5
    %v318 = vrcp.pop %v317
    %v319 = vmul.f32 %v317, %v318
    %v320 = vsub.f32 1.0, %v319
    %v321 = vmul.f32 %v318, %v320
    %v322 = vadd.f32 %v318, %v321
    %vm323 = vweird.f32 %v317
    %vm324 = vweird.f32 %v318
    %vm325 = vmor %vm323, %vm324
    %v326 = vsel %vm325, %v318, %v322
    %v327 = vand.u32 2147483647, %v317
    %vm328 = vcmp.eq.f32.partialorder %v327, 8.507059e+37
    %v329 = vand.u32 %v317, 2147483648
    %v330 = vor.u32 1.1754944e-38, %v329
    %v331 = vsel %vm328, %v330, %v326
    %v332 = vmul.f32 %v316, %v331
    %v335 = vsel %vm132, %v278, %v272
    %v337 = vmul.f32 %v332, %v335
    %v339 = vrot.slane %v337, 1
    %v340 = vperm.slane %v337, 0
    %v341 = vperm.slane %v339, 0
    %v344 = vmul.f32 %v109, %v340
    %v345 = vmul.f32 %v112, %v341
    %346 = vmatpush.msra.mxu0 %v81
    %347 = vmatpush.msra.mxu0 %v80
    %348 = vmatpush.msra.mxu0 %v79
    %349 = vmatpush.msra.mxu0 %v78
    %350 = vmatpush.msra.mxu0 %v77
    %351 = vmatpush.msra.mxu0 %v76
    %352 = vmatpush.msra.mxu0 %v75
    %353 = vmatpush.msra.mxu0 %v74
    %354 = vmatpush.msra.mxu0 %v73
    %355 = vmatpush.msra.mxu0 %v72
    %356 = vmatpush.msra.mxu0 %v71
    %357 = vmatpush.msra.mxu0 %v70
    %358 = vmatpush.msra.mxu0 %v69
    %359 = vmatpush.msra.mxu0 %v68
    %360 = vmatpush.msra.mxu0 %v67
    %361 = vmatpush.msra.mxu0 %v66
    %362 = vmatmul.f32.gmra.mxu0 %v344
    %v363 = vpop.f32.mrf.mxu0
    %v364 = vadd.f32 0.0, %v363
    %365 = vmatmul.f32.gmra.mxu0 %v345
    %v366 = vpop.f32.mrf.mxu0
    %v367 = vadd.f32 0.0, %v366
    %368 = vdwg.mxu0
    %v369 = vadd.f32 %v214, %v364
    %v370 = vadd.f32 %v217, %v367
    %371 = vmax.xlane.f32.xlu0 %v369
    %v372 = vpop.xlane.xlu0 %371
    %373 = vmax.xlane.f32.xlu0 %v370
    %v374 = vpop.xlane.xlu0 %373
    %v375 = vsub.f32 %v369, %v372
    %v376 = vsub.f32 %v370, %v374
    %v377 = vmul.f32 %v375, 1.442695
    %v378 = vpow.pop %v377
    %v379 = vmul.f32 %v376, 1.442695
    %v380 = vpow.pop %v379
    %381 = vadd.xlane.f32.xlu0 %v378
    %v382 = vpop.xlane.xlu0 %381
    %383 = vadd.xlane.f32.xlu0 %v380
    %v384 = vpop.xlane.xlu0 %383
    %v385 = vrcp.pop %v382
    %v386 = vmul.f32 %v382, %v385
    %v387 = vsub.f32 1.0, %v386
    %v388 = vmul.f32 %v385, %v387
    %v389 = vadd.f32 %v385, %v388
    %vm390 = vweird.f32 %v382
    %vm391 = vweird.f32 %v385
    %vm392 = vmor %vm390, %vm391
    %v393 = vsel %vm392, %v385, %v389
    %v394 = vand.u32 2147483647, %v382
    %vm395 = vcmp.eq.f32.partialorder %v394, 8.507059e+37
    %v396 = vand.u32 %v382, 2147483648
    %v397 = vor.u32 1.1754944e-38, %v396
    %v398 = vsel %vm395, %v397, %v393
    %v399 = vmul.f32 32.0, %v398
    %v400 = vrcp.pop %v384
    %v401 = vmul.f32 %v384, %v400
    %v402 = vsub.f32 1.0, %v401
    %v403 = vmul.f32 %v400, %v402
    %v404 = vadd.f32 %v400, %v403
    %vm405 = vweird.f32 %v384
    %vm406 = vweird.f32 %v400
    %vm407 = vmor %vm405, %vm406
    %v408 = vsel %vm407, %v400, %v404
    %v409 = vand.u32 2147483647, %v384
    %vm410 = vcmp.eq.f32.partialorder %v409, 8.507059e+37
    %v411 = vand.u32 %v384, 2147483648
    %v412 = vor.u32 1.1754944e-38, %v411
    %v413 = vsel %vm410, %v412, %v408
    %v414 = vmul.f32 32.0, %v413
    %v415 = vmul.f32 %v378, %v399
    %v416 = vmul.f32 %v380, %v414
    %v417 = vmul.f32 %v415, %v109
    %v418 = vmul.f32 %v416, %v112
    %v419 = vrot.slane %v417, 4
    %v420 = vadd.f32 %v417, %v419
    %v421 = vrot.slane %v420, 2
    %v422 = vadd.f32 %v420, %v421
    %v423 = vrot.slane %v422, 1
    %v424 = vadd.f32 %v422, %v423
    %v425 = vrot.slane %v418, 4
    %v426 = vadd.f32 %v418, %v425
    %v427 = vrot.slane %v426, 2
    %v428 = vadd.f32 %v426, %v427
    %v429 = vrot.slane %v428, 1
    %v430 = vadd.f32 %v428, %v429
    %v431 = vmul.f32 %v424, %v424
    %v432 = vmul.f32 %v430, %v430
    %v435 = vsel %vm132, %v432, %v431
    %437 = vmatpush.msra.mxu0 %v81
    %438 = vmatpush.msra.mxu0 %v80
    %439 = vmatpush.msra.mxu0 %v79
    %440 = vmatpush.msra.mxu0 %v78
    %441 = vmatpush.msra.mxu0 %v77
    %442 = vmatpush.msra.mxu0 %v76
    %443 = vmatpush.msra.mxu0 %v75
    %444 = vmatpush.msra.mxu0 %v74
    %445 = vmatpush.msra.mxu0 %v73
    %446 = vmatpush.msra.mxu0 %v72
    %447 = vmatpush.msra.mxu0 %v71
    %448 = vmatpush.msra.mxu0 %v70
    %449 = vmatpush.msra.mxu0 %v69
    %450 = vmatpush.msra.mxu0 %v68
    %451 = vmatpush.msra.mxu0 %v67
    %452 = vmatpush.msra.mxu0 %v66
    %453 = vmatmul.f32.gmra.mxu0 %v435
    %v454 = vpop.f32.mrf.mxu0
    %v455 = vadd.f32 1e-10, %v454
    %456 = vdwg.mxu0
    %v457 = vrsqrt.pop %v455
    %v458 = vmul.f32 %v457, %v455
    %v459 = vmul.f32 %v458, %v457
    %v460 = vmul.f32 0.5, %v459
    %v461 = vsub.f32 1.5, %v460
    %v462 = vmul.f32 %v457, %v461
    %v463 = vmul.f32 %v455, %v462
    %vm464 = vcmp.eq.f32.partialorder %v455, inf
    %v465 = vsel %vm464, %v455, %v463
    %vm466 = vcmp.eq.f32.partialorder %v455, 0.0
    %v467 = vand.u32 %v455, 2147483648
    %v468 = vsel %vm466, %v467, %v465
    %v469 = vadd.f32 %v455, 0.5
    %v470 = vrcp.pop %v469
    %v471 = vmul.f32 %v469, %v470
    %v472 = vsub.f32 1.0, %v471
    %v473 = vmul.f32 %v470, %v472
    %v474 = vadd.f32 %v470, %v473
    %vm475 = vweird.f32 %v469
    %vm476 = vweird.f32 %v470
    %vm477 = vmor %vm475, %vm476
    %v478 = vsel %vm477, %v470, %v474
    %v479 = vand.u32 2147483647, %v469
    %vm480 = vcmp.eq.f32.partialorder %v479, 8.507059e+37
    %v481 = vand.u32 %v469, 2147483648
    %v482 = vor.u32 1.1754944e-38, %v481
    %v483 = vsel %vm480, %v482, %v478
    %v484 = vmul.f32 %v468, %v483
    %v487 = vsel %vm132, %v430, %v424
    %v489 = vmul.f32 %v484, %v487
    %490 = vst [vmem:[#allocation8] sm:$0x3] %v489
    // Predicated region
    $region26: #{tpu_custom_call.1} parent=1 // pred_check
      _
    $region27: #{tpu_custom_call.1} parent=1 // pred_check_branch
      %492 = sbr.rel (0) target = $region29
    $region28: #{tpu_custom_call.1} parent=1 // pred_region
      %494 = vsyncadd [#allocation4], 0
      %s496 = sshll.u32 [#allocation8], 4
      %s497 = int_to_ptr.vmem [resolvable:$true] %s496
      %s498 = sshll.u32 %s3, 4
      %s499 = int_to_ptr.hbm [resolvable:$true] %s498
      %501 = dma.vmem_to_hbm [thread:$0]  %s497, 32, %s499, [#allocation4]
    $region29: #{tpu_custom_call.1} parent=1 // pred_fallthru
      _
    // Predicated region
    $region30: #{tpu_custom_call.1} parent=1 // pred_check
      _
    $region31: #{tpu_custom_call.1} parent=1 // pred_check_branch
      %503 = sbr.rel (0) target = $region33
    $region32: #{tpu_custom_call.1} parent=1 // pred_region
      %505 = dma.done [#allocation4], 32
    $region33: #{tpu_custom_call.1} parent=1 // pred_fallthru
      _
    %506 = vsyncpa [#allocation3], 1
    %507 = vsyncpa [#allocation6], 1
    %508 = vsyncpa [#allocation4], 1

</llo_original>
